<compile_context>
chip_gen: v6e
topology: v6e:2x2x1
jax: 0.10.0
libtpu: 0.0.40
codegen_flags: <defaults>
</compile_context>

<pallas_src>
import jax
import jax.numpy as jnp
from jax.experimental import pallas as pl
from jax.experimental.pallas import tpu as pltpu

_LANE = 128  # TPU lane width (last-dim granularity)


def _rbf_kernel(x_ref, neg_inv_ref, o_ref):
    # x_ref: (TR, TC)   neg_inv_ref: (1, TC) f32   o_ref: (TR, TC)
    x = x_ref[...].astype(jnp.float32)
    o_ref[...] = jnp.exp((x * x) * neg_inv_ref[...]).astype(o_ref.dtype)


def _budgets():
    """(block_bytes, vmem_limit_bytes) per TPU generation."""
    try:
        kind = jax.devices()[0].device_kind.lower()
    except Exception:
        kind = ""
    if "v7" in kind:
        # ~3.2 TB/s HBM: larger tiles amortize the ~0.35 us/step overhead;
        # 2 bufs x (in + out) x 8 MiB + scale stays well under 64 MiB physical.
        return 8 * 1024 * 1024, 48 * 1024 * 1024
    # v5e/v6e: 4 MiB tiles already reach the HBM roofline; 32 MiB scoped VMEM
    # keeps the double-buffered pipeline comfortable (v5e default is 16 MiB).
    return 4 * 1024 * 1024, 32 * 1024 * 1024


def rbf_forward(x_nchw, scale_1c11):
    """y = exp(-x^2 / scale^2), scale broadcast over (N, H, W)."""
    N, C, H, W = x_nchw.shape
    HW = H * W
    rows, cols = N, C * HW
    dtype = x_nchw.dtype
    itemsize = jnp.dtype(dtype).itemsize
    sub = (8 * 4) // itemsize  # sublane pack: 8 (f32) / 16 (bf16) / 32 (int8/fp8)

    block_bytes, vmem_limit = _budgets()

    x2d = x_nchw.reshape(rows, cols)

    # -1/scale^2 per column, kept in f32 (tiny C*H*W-element precompute).
    neg_inv = -1.0 / (scale_1c11.reshape(C).astype(jnp.float32) ** 2)
    neg_inv_row = jnp.repeat(neg_inv, HW)[None, :]  # (1, cols) f32, lane-dense

    # ---- tile selection (no padding: Pallas masks partial edge blocks) ----
    if cols * sub * itemsize <= block_bytes:
        TC = cols  # full-width rows in one block (equal-to-full-dim is legal)
    else:
        # Wide, 128-aligned column tiles (long contiguous DMA bursts), capped
        # so TR can grow and the (1, TC) scale refetch stays negligible.
        tc_cap = max(2048, (block_bytes // (4 * sub * itemsize)) // _LANE * _LANE)
        TC = min(tc_cap, pl.cdiv(cols, _LANE) * _LANE)

    tr = max(sub, (block_bytes // (TC * itemsize)) // sub * sub)
    TR = rows if tr >= rows else tr  # full dim (any size) or a sublane multiple

    # Guarantee >= 2 grid steps when possible so v7x's second TensorCore
    # ("parallel" axes) is not left idle on small/medium tensors.
    if pl.cdiv(rows, TR) * pl.cdiv(cols, TC) == 1:
        if rows >= 2 * sub:
            TR = pl.cdiv(pl.cdiv(rows, 2), sub) * sub
        elif cols >= 2 * _LANE:
            TC = pl.cdiv(pl.cdiv(cols, 2), _LANE) * _LANE

    grid = (pl.cdiv(rows, TR), pl.cdiv(cols, TC))  # keep cols innermost

    total = N * C * HW
    out2d = pl.pallas_call(
        _rbf_kernel,
        out_shape=jax.ShapeDtypeStruct((rows, cols), dtype),
        grid_spec=pltpu.PrefetchScalarGridSpec(
            num_scalar_prefetch=0,
            grid=grid,
            in_specs=[
                pl.BlockSpec((TR, TC), lambda i, j: (i, j)),
                pl.BlockSpec((1, TC), lambda i, j: (0, j)),
            ],
            out_specs=pl.BlockSpec((TR, TC), lambda i, j: (i, j)),
        ),
        compiler_params=pltpu.CompilerParams(
            # Elementwise, no cross-iteration carry -> both axes parallel.
            dimension_semantics=("parallel", "parallel"),
            vmem_limit_bytes=vmem_limit,
        ),
        cost_estimate=pl.CostEstimate(
            flops=2 * total,
            transcendentals=total,
            bytes_accessed=2 * total * itemsize + cols * 4,
        ),
    )(x2d, neg_inv_row)

    return out2d.reshape(N, C, H, W)


if __name__ == "__main__":
    key = jax.random.PRNGKey(0)
    kx, ks = jax.random.split(key)

    N, C, H, W = 2, 4, 16, 16
    mean, stddev = 0.2, 0.05

    x = jax.random.normal(kx, (N, C, H, W), dtype=jnp.float32)
    # deterministic init of the learnable scale, matching torch normal_(mean, std)
    scale = mean + stddev * jax.random.normal(ks, (1, C, 1, 1), dtype=jnp.float32)

    y = rbf_forward(x, scale)
    jax.block_until_ready(y)
    y_ref = jnp.exp(-(x ** 2) / (scale ** 2))
    assert y.shape == (N, C, H, W)
    assert jnp.allclose(y, y_ref, atol=1e-5, rtol=1e-5)

    # Non-128-multiple spatial size: exercises the no-pad / masked-edge path.
    x2 = jax.random.normal(kx, (2, 4, 7, 7), dtype=jnp.float32)
    y2 = rbf_forward(x2, scale)
    jax.block_until_ready(y2)
    y2_ref = jnp.exp(-(x2 ** 2) / (scale ** 2))
    assert jnp.allclose(y2, y2_ref, atol=1e-5, rtol=1e-5)

    # bf16 input: dtype-aware sublane rounding + f32 math inside the kernel.
    xb = x.astype(jnp.bfloat16)
    yb = rbf_forward(xb, scale)
    jax.block_until_ready(yb)
    yb_ref = jnp.exp(-(xb.astype(jnp.float32) ** 2) / (scale ** 2))
    assert jnp.allclose(yb.astype(jnp.float32), yb_ref, atol=2e-2, rtol=2e-2)

    print("KERNEL_OK")
</pallas_src>

<mosaic_0001>
module attributes {stable_mosaic.version = 11 : i64} {
  func.func @_rbf_kernel(%arg0: i32, %arg1: i32, %arg2: memref<2x512xf32, #tpu.memory_space<vmem>>, %arg3: memref<1x512xf32, #tpu.memory_space<vmem>>, %arg4: memref<2x512xf32, #tpu.memory_space<vmem>>) attributes {dimension_semantics = [#tpu.dimension_semantics<parallel>, #tpu.dimension_semantics<parallel>], iteration_bounds = array<i64: 1, 2>, scalar_prefetch = 0 : i64, scratch_operands = 0 : i64, tpu.core_type = #tpu.core_type<tc>, window_params = [{transform_indices = @transform_0, window_bounds = array<i64: 2, 512>}, {transform_indices = @transform_1, window_bounds = array<i64: 1, 512>}, {transform_indices = @transform_2, window_bounds = array<i64: 2, 512>}]} {
    %c0 = arith.constant 0 : index
    %c0_0 = arith.constant 0 : index
    %0 = vector.load %arg2[%c0, %c0_0] : memref<2x512xf32, #tpu.memory_space<vmem>>, vector<2x512xf32>
    %1 = arith.mulf %0, %0 : vector<2x512xf32>
    %c0_1 = arith.constant 0 : index
    %c0_2 = arith.constant 0 : index
    %2 = vector.load %arg3[%c0_1, %c0_2] : memref<1x512xf32, #tpu.memory_space<vmem>>, vector<1x512xf32>
    %3 = vector.broadcast %2 : vector<1x512xf32> to vector<2x512xf32>
    %4 = arith.mulf %1, %3 : vector<2x512xf32>
    %5 = math.exp %4 : vector<2x512xf32>
    %c0_3 = arith.constant 0 : index
    %c0_4 = arith.constant 0 : index
    %6 = vector.load %arg4[%c0_3, %c0_4] : memref<2x512xf32, #tpu.memory_space<vmem>>, vector<2x512xf32>
    tpu.vector_store %arg4[%c0_3, %c0_4], %5 {strides = array<i32>} : memref<2x512xf32, #tpu.memory_space<vmem>>, vector<2x512xf32>,
    return
  }
  func.func @transform_0(%arg0: i32, %arg1: i32) -> (i32, i32) {
    %c0_i32 = arith.constant 0 : i32
    return %arg0, %arg1 : i32, i32
  }
  func.func @transform_1(%arg0: i32, %arg1: i32) -> (i32, i32) {
    %c0_i32 = arith.constant 0 : i32
    %c0_i32_0 = arith.constant 0 : i32
    return %c0_i32, %arg1 : i32, i32
  }
  func.func @transform_2(%arg0: i32, %arg1: i32) -> (i32, i32) {
    %c0_i32 = arith.constant 0 : i32
    return %arg0, %arg1 : i32, i32
  }
}

</mosaic_0001>

<llo_original>
// kernel: tpu_custom_call.1
$region0: #{tpu_custom_call.1}
  #allocation0 [shape = 'u32[]', space=smem, size = 0x4, offset = 0x4, fixed_abs, tag = 'smem constant byte address 0x4 - core index']
  #allocation1 [shape = 'u32[144,128]{1,0:T(1,128)}', space=vmem, size = 0x12000, scoped, tag = 'internal scratch']
  %s0 = inlined_call_operand.hbm [shape: f32[2,1024], index: 0, kind: input, shape index: {}]
  %s1 = inlined_call_operand.hbm [shape: f32[1,1024], index: 1, kind: input, shape index: {}]
  %s2 = inlined_call_operand.hbm [shape: f32[2,1024], index: 2, kind: output, shape index: {}]
  %s3 = sld [smem:[#allocation0]]
  $region49: #{tpu_custom_call.1} parent=0
    _
  %s5 = ssub.s32 1, %s3
  %s6 = scalar_select 0, %s5, %s3
  $region1: #{tpu_custom_call.1} parent=0
    #allocation2 [shape = 'u8[8192]{0}', space=vmem, size = 0x2000, scoped, tag = 'input window, operand 0']
    #allocation3 [shape = 's32[2]{0}', space=sflag, size = 0x8, scoped, tag = 'scoped memory for tpu_custom_call.1']
    #allocation4 [shape = 's32[2]{0}', space=sflag, size = 0x8, scoped, tag = 'scoped memory for tpu_custom_call.1']
    #allocation5 [shape = 'u8[4096]{0}', space=vmem, size = 0x1000, scoped, tag = 'input window, operand 1']
    #allocation6 [shape = 's32[2]{0}', space=sflag, size = 0x8, scoped, tag = 'scoped memory for tpu_custom_call.1']
    #allocation7 [shape = 'u8[8192]{0}', space=vmem, size = 0x2000, scoped, tag = 'output window, operand 0']
    %7 = vsyncpa [#allocation3], 0
    %s8 = scalar_lea.sflag [#allocation3], 1
    %9 = vsyncpa %s8, 0
    %10 = vsyncpa [#allocation6], 0
    %s11 = scalar_lea.sflag [#allocation6], 1
    %12 = vsyncpa %s11, 0
    %13 = vsyncpa [#allocation4], 0
    %s14 = scalar_lea.sflag [#allocation4], 1
    %15 = vsyncpa %s14, 0
    loop: start=0, step=1, limit=4
    $region2: #{tpu_custom_call.1} parent=1 // loop_pre_header
      _
    $region3: #{tpu_custom_call.1} parent=1 // loop_header
      %s17 = sphi 0, %s21
      %p18 = scmp.ge.s32.totalorder %s17, 4
      %s24 = sphi 0, %s36
      %s25 = sphi 0, %s32
      %s26 = sphi 0, %s24
      %s27 = sphi 0, %s25
      %s28 = sphi 0, %s26
      %s29 = sphi 0, %s27
      %s41 = sphi 0, %s43
      %s44 = sphi 0, %s41
      %s45 = sphi 0, %s44
      %s61 = sphi 0, %s45
      %s67 = sphi 0, %s69
      %s70 = sphi 0, %s67
      %s71 = sphi 0, %s70
      %s87 = sphi 0, %s71
      %s95 = sphi 0, %s97
      %s98 = sphi 0, %s95
      %s99 = sphi 0, %s98
      %s115 = sphi 0, %s99
    $region4: #{tpu_custom_call.1} parent=1 // loop_header_branch
      %20 = sbr.rel (%p18) target = $region8
    $region5: #{tpu_custom_call.1} parent=1 // loop_body
      %s22 = ssub.s32 %s17, 1
      %s23 = ssub.s32 %s17, 2
      %s30 = sadd.s32 1, %s25
      %p31 = scmp.ge.s32.totalorder %s30, 2
      %s32 = scalar_select %p31, 0, %s30
      %s33 = sadd.s32 1, %s24
      %s34 = scalar_select %p31, %s33, %s24
      %p35 = scmp.ge.s32.totalorder %s34, 1
      %s36 = scalar_select %p35, 0, %s34
      %s37 = ssub.s32 %s24, %s36
      %s38 = ssub.s32 %s25, %s32
      %s39 = sor.u32 %s37, %s38
      %p40 = scmp.eq.s32.totalorder %s39, 0
      %s42 = sadd.s32 %s41, 1
      %s43 = scalar_select %p40, %s41, %s42
      %p46 = pneg %p40
      %p47 = scmp.eq.s32.totalorder %s17, 1
      %p48 = por %p46, %p47
      %p49 = scmp.ne.s32.totalorder %s41, %s44
      %p50 = scmp.eq.s32.totalorder %s17, 0
      %p51 = por %p49, %p50
      %p52 = scmp.ne.s32.totalorder %s41, %s44
      %p53 = scmp.eq.s32.totalorder %s22, 1
      %p54 = por %p52, %p53
      %p55 = scmp.ne.s32.totalorder %s44, %s45
      %p56 = scmp.eq.s32.totalorder %s22, 0
      %p57 = por %p55, %p56
      %p58 = scmp.ne.s32.totalorder %s44, %s45
      %p59 = scmp.eq.s32.totalorder %s23, 1
      %p60 = por %p58, %p59
      %p62 = scmp.ne.s32.totalorder %s45, %s61
      %p63 = scmp.eq.s32.totalorder %s23, 0
      %p64 = por %p62, %p63
      %s65 = ssub.s32 %s25, %s32
      %p66 = scmp.eq.s32.totalorder %s65, 0
      %s68 = sadd.s32 %s67, 1
      %s69 = scalar_select %p66, %s67, %s68
      %p72 = pneg %p66
      %p73 = scmp.eq.s32.totalorder %s17, 1
      %p74 = por %p72, %p73
      %p75 = scmp.ne.s32.totalorder %s67, %s70
      %p76 = scmp.eq.s32.totalorder %s17, 0
      %p77 = por %p75, %p76
      %p78 = scmp.ne.s32.totalorder %s67, %s70
      %p79 = scmp.eq.s32.totalorder %s22, 1
      %p80 = por %p78, %p79
      %p81 = scmp.ne.s32.totalorder %s70, %s71
      %p82 = scmp.eq.s32.totalorder %s22, 0
      %p83 = por %p81, %p82
      %p84 = scmp.ne.s32.totalorder %s70, %s71
      %p85 = scmp.eq.s32.totalorder %s23, 1
      %p86 = por %p84, %p85
      %p88 = scmp.ne.s32.totalorder %s71, %s87
      %p89 = scmp.eq.s32.totalorder %s23, 0
      %p90 = por %p88, %p89
      %s91 = ssub.s32 %s24, %s36
      %s92 = ssub.s32 %s25, %s32
      %s93 = sor.u32 %s91, %s92
      %p94 = scmp.eq.s32.totalorder %s93, 0
      %s96 = sadd.s32 %s95, 1
      %s97 = scalar_select %p94, %s95, %s96
      %p100 = pneg %p94
      %p101 = scmp.eq.s32.totalorder %s17, 1
      %p102 = por %p100, %p101
      %p103 = scmp.ne.s32.totalorder %s95, %s98
      %p104 = scmp.eq.s32.totalorder %s17, 0
      %p105 = por %p103, %p104
      %p106 = scmp.ne.s32.totalorder %s95, %s98
      %p107 = scmp.eq.s32.totalorder %s22, 1
      %p108 = por %p106, %p107
      %p109 = scmp.ne.s32.totalorder %s98, %s99
      %p110 = scmp.eq.s32.totalorder %s22, 0
      %p111 = por %p109, %p110
      %p112 = scmp.ne.s32.totalorder %s98, %s99
      %p113 = scmp.eq.s32.totalorder %s23, 1
      %p114 = por %p112, %p113
      %p116 = scmp.ne.s32.totalorder %s99, %s115
      %p117 = scmp.eq.s32.totalorder %s23, 0
      %p118 = por %p116, %p117
      %p119 = scmp.le.s32.totalorder 1, %s17
      %p120 = scmp.lt.s32.totalorder %s17, 3
      %p121 = pnand %p119, %p120
      %p122 = pneg %p121
      // Predicated region
      $region9: #{tpu_custom_call.1} parent=5 // pred_check
        _
      $region10: #{tpu_custom_call.1} parent=5 // pred_check_branch
        %124 = sbr.rel (%p121) target = $region12
      $region11: #{tpu_custom_call.1} parent=5 // pred_region
        %s125 = ssub.s32 %s17, 1
      $region12: #{tpu_custom_call.1} parent=5 // pred_fallthru
        _
      %p126 = scmp.lt.s32.totalorder %s17, 2
      // Predicated region
      $region13: #{tpu_custom_call.1} parent=5 // pred_check
        %p127 = pneg %p126
      $region14: #{tpu_custom_call.1} parent=5 // pred_check_branch
        %129 = sbr.rel (%p127) target = $region16
      $region15: #{tpu_custom_call.1} parent=5 // pred_region
        // Predicated region
        $region17: #{tpu_custom_call.1} parent=15 // pred_check
          %p130 = pneg %p51
        $region18: #{tpu_custom_call.1} parent=15 // pred_check_branch
          %132 = sbr.rel (%p130) target = $region20
        $region19: #{tpu_custom_call.1} parent=15 // pred_region
          %s133 = sand.u32 %s41, 1
          %s134 = scalar_lea.sflag [#allocation3], %s133
          %s135 = sand.u32 %s41, 1
          %s136 = smul.addr %s135, 8
          %s137 = scalar_lea.vmem [#allocation2], %s136
          %s138 = smul.u32 4, %s25
          %s140 = ssub.s32 128, 128
          %141 = vsyncadd %s134, %s140
          %s142 = smul.addr %s24, 8
          %s143 = sadd.s32 %s138, %s142
          %s144 = smul.addr %s143, 32
          %s145 = scalar_lea.hbm %s0, %s144
          %s147 = sshll.u32 %s137, 4
          %s148 = int_to_ptr.vmem [resolvable:$true] %s147
          %150 = dma.hbm_to_vmem [thread:$0]  %s145, 128, %s148, %s134
        $region20: #{tpu_custom_call.1} parent=15 // pred_fallthru
          _
        // Predicated region
        $region21: #{tpu_custom_call.1} parent=15 // pred_check
          %p151 = pneg %p77
        $region22: #{tpu_custom_call.1} parent=15 // pred_check_branch
          %153 = sbr.rel (%p151) target = $region24
        $region23: #{tpu_custom_call.1} parent=15 // pred_region
          %s154 = sand.u32 %s67, 1
          %s155 = scalar_lea.sflag [#allocation6], %s154
          %s156 = sand.u32 %s67, 1
          %s157 = smul.addr %s156, 4
          %s158 = scalar_lea.vmem [#allocation5], %s157
          %s159 = smul.u32 4, %s25
          %s161 = ssub.s32 64, 64
          %162 = vsyncadd %s155, %s161
          %s163 = smul.addr %s159, 16
          %s164 = scalar_lea.hbm %s1, %s163
          %s166 = sshll.u32 %s158, 4
          %s167 = int_to_ptr.vmem [resolvable:$true] %s166
          %169 = dma.hbm_to_vmem [thread:$0]  %s164, 64, %s167, %s155
        $region24: #{tpu_custom_call.1} parent=15 // pred_fallthru
          _
      $region16: #{tpu_custom_call.1} parent=5 // pred_fallthru
        _
      %p170 = scmp.le.s32.totalorder 1, %s17
      %p171 = scmp.lt.s32.totalorder %s17, 3
      %p172 = pnand %p170, %p171
      %p173 = pneg %p172
      // Predicated region
      $region25: #{tpu_custom_call.1} parent=5 // pred_check
        _
      $region26: #{tpu_custom_call.1} parent=5 // pred_check_branch
        %175 = sbr.rel (%p172) target = $region28
      $region27: #{tpu_custom_call.1} parent=5 // pred_region
        %s176 = ssub.s32 %s17, 1
        %s177 = sand.u32 %s44, 1
        %s178 = scalar_lea.sflag [#allocation3], %s177
        %s179 = sand.u32 %s44, 1
        %s180 = smul.addr %s179, 8
        %s181 = scalar_lea.vmem [#allocation2], %s180
        // Predicated region
        $region29: #{tpu_custom_call.1} parent=27 // pred_check
          %p182 = pneg %p57
        $region30: #{tpu_custom_call.1} parent=27 // pred_check_branch
          %184 = sbr.rel (%p182) target = $region32
        $region31: #{tpu_custom_call.1} parent=27 // pred_region
          %185 = dma.done %s178, 128
        $region32: #{tpu_custom_call.1} parent=27 // pred_fallthru
          _
        %s186 = sand.u32 %s70, 1
        %s187 = scalar_lea.sflag [#allocation6], %s186
        %s188 = sand.u32 %s70, 1
        %s189 = smul.addr %s188, 4
        %s190 = scalar_lea.vmem [#allocation5], %s189
        // Predicated region
        $region33: #{tpu_custom_call.1} parent=27 // pred_check
          %p191 = pneg %p83
        $region34: #{tpu_custom_call.1} parent=27 // pred_check_branch
          %193 = sbr.rel (%p191) target = $region36
        $region35: #{tpu_custom_call.1} parent=27 // pred_region
          %194 = dma.done %s187, 64
        $region36: #{tpu_custom_call.1} parent=27 // pred_fallthru
          _
        %s195 = sand.u32 %s44, 1
        %s196 = scalar_lea.sflag [#allocation3], %s195
        %s197 = sand.u32 %s44, 1
        %s198 = smul.addr %s197, 8
        %s199 = scalar_lea.vmem [#allocation2], %s198
        %p200 = pneg %p57
        %p201 = pneg %p54
        %s202 = sand.u32 %s70, 1
        %s203 = scalar_lea.sflag [#allocation6], %s202
        %s204 = sand.u32 %s70, 1
        %s205 = smul.addr %s204, 4
        %s206 = scalar_lea.vmem [#allocation5], %s205
        %p207 = pneg %p83
        %p208 = pneg %p80
        %p209 = pneg %p111
        %p210 = pneg %p108
        %s211 = sand.u32 %s98, 1
        %s212 = scalar_lea.sflag [#allocation4], %s211
        %s213 = sand.u32 %s98, 1
        %s214 = smul.addr %s213, 8
        %s215 = scalar_lea.vmem [#allocation7], %s214
        %s216 = smul.u32 4, %s27
        %s217 = smul.u32 4, %s27
        %s218 = smul.u32 4, %s27
        %v219 = vld [vmem:[%s181] sm:$0xff]
        %v220 = vmul.f32 %v219, %v219
        %v221 = vld [vmem:[%s190] sm:$0xf]
        %v223 = vlaneseq
        %v224 = vshrl.u32 %v223, 7
        %v225 = vsub.s32 0, %v224
        %v226 = vrot.slane %v221, %v225
        %v227 = vlaneseq
        %v228 = vshrl.u32 %v227, 7
        %v229 = vsub.s32 1, %v228
        %v230 = vrot.slane %v221, %v229
        %v231 = vlaneseq
        %v232 = vshrl.u32 %v231, 7
        %v233 = vsub.s32 2, %v232
        %v234 = vrot.slane %v221, %v233
        %v235 = vlaneseq
        %v236 = vshrl.u32 %v235, 7
        %v237 = vsub.s32 3, %v236
        %v238 = vrot.slane %v221, %v237
        %v239 = vcombine.low %v226, %v230
        %v240 = vcombine.low %v234, %v238
        %v242 = vunpack.c.l.s4 1983009808
        %v243 = vunpack.c.0.s8 %v242
        %v244 = vlaneseq
        %v245 = vshrl.u32 %v244, 7
        %v246 = vsub.s32 %v243, %v245
        %v247 = vrot.slane %v239, %v246
        %v249 = vunpack.c.l.s4 1983009808
        %v250 = vunpack.c.0.s8 %v249
        %v251 = vlaneseq
        %v252 = vshrl.u32 %v251, 7
        %v253 = vsub.s32 %v250, %v252
        %v254 = vrot.slane %v240, %v253
        %v255 = vcombine.low %v247, %v254
        %v257 = vmul.f32 %v220, %v255
        %v258 = vmul.f32 %v257, 1.442695
        %v259 = vpow.pop %v258
        %260 = vst [vmem:[%s215] sm:$0xff] %v259
        %s261 = sand.u32 %s98, 1
        %s262 = scalar_lea.sflag [#allocation4], %s261
        %s263 = sand.u32 %s98, 1
        %s264 = smul.addr %s263, 8
        %s265 = scalar_lea.vmem [#allocation7], %s264
        // Predicated region
        $region37: #{tpu_custom_call.1} parent=27 // pred_check
          %p266 = pneg %p108
        $region38: #{tpu_custom_call.1} parent=27 // pred_check_branch
          %268 = sbr.rel (%p266) target = $region40
        $region39: #{tpu_custom_call.1} parent=27 // pred_region
          %s269 = smul.u32 4, %s27
          %s271 = ssub.s32 128, 128
          %272 = vsyncadd %s262, %s271
          %s273 = smul.addr %s26, 8
          %s274 = sadd.s32 %s269, %s273
          %s275 = smul.addr %s274, 32
          %s276 = scalar_lea.hbm %s2, %s275
          %s278 = sshll.u32 %s265, 4
          %s279 = int_to_ptr.vmem [resolvable:$true] %s278
          %281 = dma.vmem_to_hbm [thread:$0]  %s279, 128, %s276, %s262
        $region40: #{tpu_custom_call.1} parent=27 // pred_fallthru
          _
      $region28: #{tpu_custom_call.1} parent=5 // pred_fallthru
        _
      %p282 = scmp.le.s32.totalorder 2, %s17
      // Predicated region
      $region41: #{tpu_custom_call.1} parent=5 // pred_check
        %p283 = pneg %p282
      $region42: #{tpu_custom_call.1} parent=5 // pred_check_branch
        %285 = sbr.rel (%p283) target = $region44
      $region43: #{tpu_custom_call.1} parent=5 // pred_region
        %s286 = ssub.s32 %s17, 2
        // Predicated region
        $region45: #{tpu_custom_call.1} parent=43 // pred_check
          %p287 = pneg %p114
        $region46: #{tpu_custom_call.1} parent=43 // pred_check_branch
          %289 = sbr.rel (%p287) target = $region48
        $region47: #{tpu_custom_call.1} parent=43 // pred_region
          %s290 = sand.u32 %s99, 1
          %s291 = scalar_lea.sflag [#allocation4], %s290
          %s292 = sand.u32 %s99, 1
          %s293 = smul.addr %s292, 8
          %s294 = scalar_lea.vmem [#allocation7], %s293
          %295 = dma.done %s291, 128
        $region48: #{tpu_custom_call.1} parent=43 // pred_fallthru
          _
      $region44: #{tpu_custom_call.1} parent=5 // pred_fallthru
        _
    $region6: #{tpu_custom_call.1} parent=1 // loop_footer
      %s21 = sadd.s32 1, %s17
    $region7: #{tpu_custom_call.1} parent=1 // loop_footer_branch
      %16 = sbr.rel target = $region3
    $region8: #{tpu_custom_call.1} parent=1 // loop_exit
      _
    %296 = vsyncpa [#allocation3], 1
    %s297 = scalar_lea.sflag [#allocation3], 1
    %298 = vsyncpa %s297, 1
    %299 = vsyncpa [#allocation6], 1
    %s300 = scalar_lea.sflag [#allocation6], 1
    %301 = vsyncpa %s300, 1
    %302 = vsyncpa [#allocation4], 1
    %s303 = scalar_lea.sflag [#allocation4], 1
    %304 = vsyncpa %s303, 1

</llo_original>
